<compile_context>
chip_gen: v7x
topology: tpu7x:2x2x1
jax: 0.10.0
libtpu: 0.0.40
codegen_flags: <defaults>
</compile_context>

<pallas_src>
import functools

import numpy as np
import jax
import jax.numpy as jnp
from jax.experimental import pallas as pl
from jax.experimental.pallas import tpu as pltpu


LANE = 128      # TPU lane width (last vreg dim)
SUBLANE = 8     # f32 sublane group


def _round_up(x, m):
    return (x + m - 1) // m * m


def _cdiv(a, b):
    return (a + b - 1) // b


def _vmem_capacity_bytes():
    """Physical VMEM per TensorCore (generation aware) with a safe fallback."""
    try:
        return int(pltpu.get_tpu_info().vmem_capacity_bytes)
    except Exception:
        return 64 << 20   # v7x per-TC VMEM; conservative lower bound for v5e/v6e


# ----------------------------------------------------------------------------
# Circuit construction (glue, plain JAX / numpy)
# ----------------------------------------------------------------------------
def _ry_matrix(theta):
    """Real single-qubit RY(theta) gate."""
    c = jnp.cos(theta / 2.0)
    s = jnp.sin(theta / 2.0)
    return jnp.stack([jnp.stack([c, -s]), jnp.stack([s, c])]).astype(jnp.float32)


@functools.lru_cache(maxsize=None)
def _circuit_constants(n_qubits, d_pad, z_cols):
    """Params-independent constants, cached per (n_qubits, pad sizes).

    inv_perm : inverse permutation of the CNOT ring so that
               CNOT_ring @ U_rot == U_rot[inv_perm, :]
    z_padded : (d_pad, z_cols) zero-padded Pauli-Z sign table,
               z[s, q] = +1 if bit q of basis state s is 0 else -1 (qubit 0 = MSB).
    Built with O(n * 2^n) vectorized numpy — no dense 2^n x 2^n matmuls.
    """
    dim = 1 << n_qubits
    perm = np.arange(dim, dtype=np.int64)
    for q in range(n_qubits):
        control, target = q, (q + 1) % n_qubits
        c_bit = n_qubits - 1 - control
        t_bit = n_qubits - 1 - target
        flip = (perm >> c_bit) & 1
        perm = perm ^ (flip << t_bit)
    inv_perm = np.argsort(perm).astype(np.int32)

    s = np.arange(dim, dtype=np.int64)[:, None]
    q = np.arange(n_qubits, dtype=np.int64)[None, :]
    bits = (s >> (n_qubits - 1 - q)) & 1
    z = (1.0 - 2.0 * bits).astype(np.float32)
    z_padded = np.zeros((d_pad, z_cols), dtype=np.float32)
    z_padded[:dim, :n_qubits] = z
    return inv_perm, z_padded


def _build_u_t_padded(params, n_qubits, d_pad, inv_perm):
    """U = CNOT_ring @ (RY(p0) ⊗ ... ⊗ RY(p_{n-1})); returns U^T zero-padded to
    (d_pad, d_pad) so that state = x_pad @ U^T_pad."""
    dim = 1 << n_qubits
    u_rot = jnp.array([[1.0]], dtype=jnp.float32)
    for q in range(n_qubits):
        u_rot = jnp.kron(u_rot, _ry_matrix(params[q]))
    u = u_rot[jnp.asarray(inv_perm), :]          # CNOT ring = row permutation
    u_t = u.T
    if d_pad != dim:
        u_t = jnp.pad(u_t, ((0, d_pad - dim), (0, d_pad - dim)))
    return u_t


# ----------------------------------------------------------------------------
# Tiling heuristics
# ----------------------------------------------------------------------------
def _choose_batch_tile(batch, d_pad):
    """Batch tile height (multiple of 8) and padded batch size.

    Large tiles amortize the ~0.35us per-grid-step overhead and keep DMAs big
    (HBM-bound regime at small d_pad); an even tile count keeps both v7x
    TensorCores busy on the 'parallel' axis; tiny batches stay one unpadded tile.
    """
    b0 = _round_up(batch, SUBLANE)
    cap = 512 if d_pad <= 512 else (256 if d_pad <= 2048 else 128)
    if b0 < 2 * SUBLANE:
        return b0, b0                        # too small to split: one tile, no extra pad
    ntiles = max(_cdiv(b0, cap), 2)          # >= 2 tiles so the parallel axis spans 2 TCs
    if ntiles % 2:
        ntiles += 1                          # even grid: balanced megacore split
    tm = _round_up(_cdiv(b0, ntiles), SUBLANE)
    return tm, tm * ntiles


# ----------------------------------------------------------------------------
# Pallas kernel (resident U^T when k_tiles == 1, K-reduction grid otherwise)
# ----------------------------------------------------------------------------
def quantum_gate_kernel(x_ref, ut_ref, z_ref, state_ref, expz_ref):
    k = pl.program_id(1)

    @pl.when(k == 0)
    def _init():
        state_ref[...] = jnp.zeros_like(state_ref)

    # state = x @ U^T ; the f32 accumulator lives directly in the output block,
    # which is resident across the k (reduction) axis.
    state_ref[...] += jnp.dot(x_ref[...], ut_ref[...],
                              preferred_element_type=jnp.float32)

    @pl.when(k == pl.num_programs(1) - 1)
    def _finalize():
        # Re-read from the output buffer so the matmul result need not stay live
        # across both matmuls (cuts vreg/VMEM pressure at large d_pad).
        s = state_ref[...]
        # Real statevector + real gates -> probabilities are amp^2.
        # TODO(synk): complex amplitudes would need a real/imag pair: re^2 + im^2.
        expz_ref[...] = jnp.dot(s * s, z_ref[...],
                                preferred_element_type=jnp.float32)


@functools.partial(
    jax.jit,
    static_argnames=("n_qubits", "precision", "single_buffer_constants", "force_k_tiles"))
def _quantum_gate_forward_impl(x, params, *, n_qubits, precision,
                               single_buffer_constants, force_k_tiles):
    batch, dim = x.shape
    assert dim == (1 << n_qubits)

    d_pad = _round_up(dim, LANE)
    z_cols = _round_up(max(n_qubits, 1), LANE)     # lane-dense <Z> output
    tm, b_pad = _choose_batch_tile(batch, d_pad)

    inv_perm, z_padded = _circuit_constants(n_qubits, d_pad, z_cols)
    u_t = _build_u_t_padded(params, n_qubits, d_pad, inv_perm)
    z_pad = jnp.asarray(z_padded)

    # Skip the pad/cast copies when the input is already aligned f32.
    x_in = x if x.dtype == jnp.float32 else x.astype(jnp.float32)
    x_is_temp = x_in is not x
    if (b_pad, d_pad) != (batch, dim):
        x_in = jnp.pad(x_in, ((0, b_pad - batch), (0, d_pad - dim)))
        x_is_temp = True

    in_dtype = jnp.bfloat16 if precision == "bf16" else jnp.float32
    if in_dtype != jnp.float32:
        # TODO(synk): bf16 MXU path trades ~1e-3 relative error for ~3-6x matmul
        # throughput; default stays f32 so the reference tolerance holds.
        x_in = x_in.astype(in_dtype)
        u_t = u_t.astype(in_dtype)
        x_is_temp = False               # dtype no longer matches the f32 state output
    itemsize_in = jnp.dtype(in_dtype).itemsize

    budget = int(_vmem_capacity_bytes() * 0.85)    # leave compiler-scratch headroom
    z_bufs = 1 if single_buffer_constants else 2
    ut_res_bufs = 1 if single_buffer_constants else 2

    def vmem_needed(tk, ut_bufs):
        return (2 * tm * tk * itemsize_in              # x tiles (double-buffered)
                + ut_bufs * tk * d_pad * itemsize_in   # U^T block(s)
                + z_bufs * d_pad * z_cols * 4          # Z sign table
                + 2 * tm * d_pad * 4                   # state output / accumulator
                + 2 * tm * z_cols * 4)                 # <Z> output

    if force_k_tiles is not None:
        k_tiles = int(force_k_tiles)
        tk = d_pad // k_tiles
        assert tk * k_tiles == d_pad and tk % LANE == 0, "invalid force_k_tiles"
    elif vmem_needed(d_pad, ut_res_bufs) <= budget:
        k_tiles, tk = 1, d_pad                         # fully resident U^T
    else:
        # K-reduction grid: tile the contraction dim so double-buffered
        # (tk, d_pad) U^T blocks fit VMEM (needed on v7x for n_qubits >= ~12).
        tk = d_pad // 2
        while tk > LANE and vmem_needed(tk, 2) > budget:
            tk //= 2
        k_tiles = d_pad // tk
        # TODO(synk): for n_qubits >= ~10 replace the dense x @ U^T with per-qubit
        # 2x2 contractions + the CNOT-ring permutation (O(n*2^n) instead of O(4^n)).

    ut_bufs = ut_res_bufs if k_tiles == 1 else 2
    needed = vmem_needed(tk, ut_bufs)
    vmem_limit = min(budget, max(int(needed * 1.5) + (4 << 20), 16 << 20))

    ut_mode = pl.Buffered(1) if (single_buffer_constants and k_tiles == 1) else None
    z_mode = pl.Buffered(1) if single_buffer_constants else None

    def _spec(shape, index_map, mode):
        if mode is None:
            return pl.BlockSpec(shape, index_map)
        return pl.BlockSpec(shape, index_map, pipeline_mode=mode)

    grid = (b_pad // tm, k_tiles)

    # Reuse x's HBM buffer for the evolved state only when x_in is a kernel-private
    # padded copy and its BlockSpec matches the state's (k_tiles == 1); with a
    # K-tiled x spec we stay conservative and skip the alias.
    io_aliases = {0: 0} if (k_tiles == 1 and x_is_temp) else {}

    state_pad, expz_pad = pl.pallas_call(
        quantum_gate_kernel,
        out_shape=(
            jax.ShapeDtypeStruct((b_pad, d_pad), jnp.float32),    # evolved state
            jax.ShapeDtypeStruct((b_pad, z_cols), jnp.float32),   # <Z_q> (lane-dense)
        ),
        grid_spec=pltpu.PrefetchScalarGridSpec(
            num_scalar_prefetch=0,
            grid=grid,
            in_specs=[
                pl.BlockSpec((tm, tk), lambda i, k: (i, k)),          # x tile
                _spec((tk, d_pad), lambda i, k: (k, 0), ut_mode),     # U^T block
                _spec((d_pad, z_cols), lambda i, k: (0, 0), z_mode),  # Z table (resident)
            ],
            out_specs=(
                pl.BlockSpec((tm, d_pad), lambda i, k: (i, 0)),
                pl.BlockSpec((tm, z_cols), lambda i, k: (i, 0)),
            ),
        ),
        compiler_params=pltpu.CompilerParams(
            dimension_semantics=("parallel", "arbitrary"),
            vmem_limit_bytes=vmem_limit,
        ),
        input_output_aliases=io_aliases,
    )(x_in, u_t, z_pad)

    return state_pad[:batch, :dim], expz_pad[:batch, :n_qubits]


def quantum_gate_forward(x, params, n_qubits, *, precision="f32", force_k_tiles=None):
    """state = (CNOT_ring @ ⊗_q RY(params_q)) x ;  <Z_q> = sum_s state_s^2 * z(s, q)."""
    kwargs = dict(n_qubits=n_qubits, precision=precision, force_k_tiles=force_k_tiles)
    try:
        return _quantum_gate_forward_impl(x, params, single_buffer_constants=True, **kwargs)
    except Exception:
        # pl.Buffered(1) single-buffering of the grid-invariant operands is not
        # available on every jax/Mosaic version; retry with default buffering.
        return _quantum_gate_forward_impl(x, params, single_buffer_constants=False, **kwargs)


# ----------------------------------------------------------------------------
# Pure-numpy float64 reference (independent dense construction) for checking
# ----------------------------------------------------------------------------
def _cnot_dense(n_qubits, control, target):
    dim = 1 << n_qubits
    mat = np.zeros((dim, dim), dtype=np.float64)
    c_bit = n_qubits - 1 - control
    t_bit = n_qubits - 1 - target
    for s in range(dim):
        s_new = s ^ (1 << t_bit) if (s >> c_bit) & 1 else s
        mat[s_new, s] = 1.0
    return mat


def reference_forward(x, params, n_qubits):
    x = np.asarray(x, dtype=np.float64)
    p = np.asarray(params, dtype=np.float64)
    dim = 1 << n_qubits
    u_rot = np.array([[1.0]], dtype=np.float64)
    for q in range(n_qubits):
        c, s = np.cos(p[q] / 2.0), np.sin(p[q] / 2.0)
        u_rot = np.kron(u_rot, np.array([[c, -s], [s, c]], dtype=np.float64))
    u_ent = np.eye(dim, dtype=np.float64)
    for q in range(n_qubits):
        u_ent = _cnot_dense(n_qubits, q, (q + 1) % n_qubits) @ u_ent
    u = u_ent @ u_rot
    state = x @ u.T
    probs = state * state
    sidx = np.arange(dim)[:, None]
    qidx = np.arange(n_qubits)[None, :]
    z = 1.0 - 2.0 * ((sidx >> (n_qubits - 1 - qidx)) & 1)
    expz = probs @ z.astype(np.float64)
    return state, expz


if __name__ == "__main__":
    # ---- small config consistent with the module: n_qubits qubits, one RY angle each
    n_qubits = 4
    n_params = n_qubits
    dim = 1 << n_qubits            # 16
    batch = 8

    key = jax.random.PRNGKey(0)
    k_params, k_x = jax.random.split(key)

    # deterministic "torch.randn(n_params)" equivalent
    params = jax.random.normal(k_params, (n_params,), dtype=jnp.float32)

    # batch of real statevectors, normalized to unit norm
    x = jax.random.normal(k_x, (batch, dim), dtype=jnp.float32)
    x = x / jnp.linalg.norm(x, axis=-1, keepdims=True)

    state, expz = quantum_gate_forward(x, params, n_qubits)
    jax.block_until_ready((state, expz))

    ref_state, ref_expz = reference_forward(x, params, n_qubits)
    np.testing.assert_allclose(np.asarray(state), ref_state, rtol=1e-4, atol=1e-5)
    np.testing.assert_allclose(np.asarray(expz), ref_expz, rtol=1e-4, atol=1e-5)

    # Exercise the K-tiled reduction path (used automatically when U^T no longer
    # fits VMEM, e.g. n_qubits >= 12 on v7x) at a small size by forcing 2 K-tiles.
    n_qubits2 = 8
    dim2 = 1 << n_qubits2          # 256
    k_p2, k_x2 = jax.random.split(jax.random.PRNGKey(1))
    params2 = jax.random.normal(k_p2, (n_qubits2,), dtype=jnp.float32)
    x2 = jax.random.normal(k_x2, (batch, dim2), dtype=jnp.float32)
    x2 = x2 / jnp.linalg.norm(x2, axis=-1, keepdims=True)

    state2, expz2 = quantum_gate_forward(x2, params2, n_qubits2, force_k_tiles=2)
    jax.block_until_ready((state2, expz2))

    ref_state2, ref_expz2 = reference_forward(x2, params2, n_qubits2)
    np.testing.assert_allclose(np.asarray(state2), ref_state2, rtol=1e-4, atol=1e-5)
    np.testing.assert_allclose(np.asarray(expz2), ref_expz2, rtol=1e-4, atol=1e-5)

    print("KERNEL_OK")
</pallas_src>

<mosaic_0001>
module attributes {stable_mosaic.version = 11 : i64} {
  func.func @quantum_gate_kernel(%arg0: i32, %arg1: i32, %arg2: memref<8x128xf32, #tpu.memory_space<vmem>>, %arg3: memref<128x128xf32, #tpu.memory_space<vmem>>, %arg4: memref<128x128xf32, #tpu.memory_space<vmem>>, %arg5: memref<8x128xf32, #tpu.memory_space<vmem>>, %arg6: memref<8x128xf32, #tpu.memory_space<vmem>>) attributes {dimension_semantics = [#tpu.dimension_semantics<parallel>, #tpu.dimension_semantics<arbitrary>], iteration_bounds = array<i64: 1, 1>, scalar_prefetch = 0 : i64, scratch_operands = 0 : i64, tpu.core_type = #tpu.core_type<tc>, window_params = [{transform_indices = @transform_0, window_bounds = array<i64: 8, 128>}, {pipeline_mode = #tpu.pipeline_mode<synchronous>, transform_indices = @transform_1, window_bounds = array<i64: 128, 128>}, {pipeline_mode = #tpu.pipeline_mode<synchronous>, transform_indices = @transform_2, window_bounds = array<i64: 128, 128>}, {transform_indices = @transform_3, window_bounds = array<i64: 8, 128>}, {transform_indices = @transform_4, window_bounds = array<i64: 8, 128>}]} {
    %c0_i32 = arith.constant 0 : i32
    %0 = arith.cmpi eq, %arg1, %c0_i32 : i32
    %1 = arith.extui %0 : i1 to i32
    %c0_i32_0 = arith.constant 0 : i32
    %2 = arith.cmpi ne, %1, %c0_i32_0 : i32
    scf.if %2 {
      %cst_10 = arith.constant 0.000000e+00 : f32
      %12 = vector.broadcast %cst_10 : f32 to vector<8x128xf32>
      %c0_11 = arith.constant 0 : index
      %c0_12 = arith.constant 0 : index
      %13 = vector.load %arg5[%c0_11, %c0_12] : memref<8x128xf32, #tpu.memory_space<vmem>>, vector<8x128xf32>
      tpu.vector_store %arg5[%c0_11, %c0_12], %12 {strides = array<i32>} : memref<8x128xf32, #tpu.memory_space<vmem>>, vector<8x128xf32>,
    } else {
    }
    %c0 = arith.constant 0 : index
    %c0_1 = arith.constant 0 : index
    %3 = vector.load %arg5[%c0, %c0_1] : memref<8x128xf32, #tpu.memory_space<vmem>>, vector<8x128xf32>
    %c0_2 = arith.constant 0 : index
    %c0_3 = arith.constant 0 : index
    %4 = vector.load %arg2[%c0_2, %c0_3] : memref<8x128xf32, #tpu.memory_space<vmem>>, vector<8x128xf32>
    %c0_4 = arith.constant 0 : index
    %c0_5 = arith.constant 0 : index
    %5 = vector.load %arg3[%c0_4, %c0_5] : memref<128x128xf32, #tpu.memory_space<vmem>>, vector<128x128xf32>
    %cst = arith.constant dense<0.000000e+00> : vector<8x128xf32>
    %6 = tpu.matmul %4, %5, %cst {dimension_numbers = #tpu.dot_dimension_numbers<[1], [0], [0], [1], [0, 0, 1, 1], [], []>} : vector<8x128xf32>, vector<128x128xf32>, vector<8x128xf32> -> vector<8x128xf32>
    %7 = arith.addf %3, %6 : vector<8x128xf32>
    %c0_6 = arith.constant 0 : index
    %c0_7 = arith.constant 0 : index
    %8 = vector.load %arg5[%c0_6, %c0_7] : memref<8x128xf32, #tpu.memory_space<vmem>>, vector<8x128xf32>
    tpu.vector_store %arg5[%c0_6, %c0_7], %7 {strides = array<i32>} : memref<8x128xf32, #tpu.memory_space<vmem>>, vector<8x128xf32>,
    %c0_i32_8 = arith.constant 0 : i32
    %9 = arith.cmpi eq, %arg1, %c0_i32_8 : i32
    %10 = arith.extui %9 : i1 to i32
    %c0_i32_9 = arith.constant 0 : i32
    %11 = arith.cmpi ne, %10, %c0_i32_9 : i32
    scf.if %11 {
      %c0_10 = arith.constant 0 : index
      %c0_11 = arith.constant 0 : index
      %12 = vector.load %arg5[%c0_10, %c0_11] : memref<8x128xf32, #tpu.memory_space<vmem>>, vector<8x128xf32>
      %13 = arith.mulf %12, %12 : vector<8x128xf32>
      %c0_12 = arith.constant 0 : index
      %c0_13 = arith.constant 0 : index
      %14 = vector.load %arg4[%c0_12, %c0_13] : memref<128x128xf32, #tpu.memory_space<vmem>>, vector<128x128xf32>
      %cst_14 = arith.constant dense<0.000000e+00> : vector<8x128xf32>
      %15 = tpu.matmul %13, %14, %cst_14 {dimension_numbers = #tpu.dot_dimension_numbers<[1], [0], [0], [1], [0, 0, 1, 1], [], []>} : vector<8x128xf32>, vector<128x128xf32>, vector<8x128xf32> -> vector<8x128xf32>
      %c0_15 = arith.constant 0 : index
      %c0_16 = arith.constant 0 : index
      %16 = vector.load %arg6[%c0_15, %c0_16] : memref<8x128xf32, #tpu.memory_space<vmem>>, vector<8x128xf32>
      tpu.vector_store %arg6[%c0_15, %c0_16], %15 {strides = array<i32>} : memref<8x128xf32, #tpu.memory_space<vmem>>, vector<8x128xf32>,
    } else {
    }
    return
  }
  func.func @transform_0(%arg0: i32, %arg1: i32) -> (i32, i32) {
    %c0_i32 = arith.constant 0 : i32
    return %arg0, %arg1 : i32, i32
  }
  func.func @transform_1(%arg0: i32, %arg1: i32) -> (i32, i32) {
    %c0_i32 = arith.constant 0 : i32
    %c0_i32_0 = arith.constant 0 : i32
    return %arg1, %c0_i32 : i32, i32
  }
  func.func @transform_2(%arg0: i32, %arg1: i32) -> (i32, i32) {
    %c0_i32 = arith.constant 0 : i32
    %c0_i32_0 = arith.constant 0 : i32
    %c0_i32_1 = arith.constant 0 : i32
    return %c0_i32, %c0_i32_0 : i32, i32
  }
  func.func @transform_3(%arg0: i32, %arg1: i32) -> (i32, i32) {
    %c0_i32 = arith.constant 0 : i32
    %c0_i32_0 = arith.constant 0 : i32
    return %arg0, %c0_i32 : i32, i32
  }
  func.func @transform_4(%arg0: i32, %arg1: i32) -> (i32, i32) {
    %c0_i32 = arith.constant 0 : i32
    %c0_i32_0 = arith.constant 0 : i32
    return %arg0, %c0_i32 : i32, i32
  }
}

module attributes {stable_mosaic.version = 11 : i64} {
  func.func @quantum_gate_kernel(%arg0: i32, %arg1: i32, %arg2: memref<8x128xf32, #tpu.memory_space<vmem>>, %arg3: memref<128x128xf32, #tpu.memory_space<vmem>>, %arg4: memref<128x128xf32, #tpu.memory_space<vmem>>, %arg5: memref<8x128xf32, #tpu.memory_space<vmem>>, %arg6: memref<8x128xf32, #tpu.memory_space<vmem>>) attributes {dimension_semantics = [#tpu.dimension_semantics<parallel>, #tpu.dimension_semantics<arbitrary>], iteration_bounds = array<i64: 1, 1>, scalar_prefetch = 0 : i64, scratch_operands = 0 : i64, tpu.core_type = #tpu.core_type<tc>, window_params = [{transform_indices = @transform_0, window_bounds = array<i64: 8, 128>}, {transform_indices = @transform_1, window_bounds = array<i64: 128, 128>}, {pipeline_mode = #tpu.pipeline_mode<synchronous>, transform_indices = @transform_2, window_bounds = array<i64: 128, 128>}, {transform_indices = @transform_3, window_bounds = array<i64: 8, 128>}, {transform_indices = @transform_4, window_bounds = array<i64: 8, 128>}]} {
    %c0_i32 = arith.constant 0 : i32
    %0 = arith.cmpi eq, %arg1, %c0_i32 : i32
    %1 = arith.extui %0 : i1 to i32
    %c0_i32_0 = arith.constant 0 : i32
    %2 = arith.cmpi ne, %1, %c0_i32_0 : i32
    scf.if %2 {
      %cst_10 = arith.constant 0.000000e+00 : f32
      %12 = vector.broadcast %cst_10 : f32 to vector<8x128xf32>
      %c0_11 = arith.constant 0 : index
      %c0_12 = arith.constant 0 : index
      %13 = vector.load %arg5[%c0_11, %c0_12] : memref<8x128xf32, #tpu.memory_space<vmem>>, vector<8x128xf32>
      tpu.vector_store %arg5[%c0_11, %c0_12], %12 {strides = array<i32>} : memref<8x128xf32, #tpu.memory_space<vmem>>, vector<8x128xf32>,
    } else {
    }
    %c0 = arith.constant 0 : index
    %c0_1 = arith.constant 0 : index
    %3 = vector.load %arg5[%c0, %c0_1] : memref<8x128xf32, #tpu.memory_space<vmem>>, vector<8x128xf32>
    %c0_2 = arith.constant 0 : index
    %c0_3 = arith.constant 0 : index
    %4 = vector.load %arg2[%c0_2, %c0_3] : memref<8x128xf32, #tpu.memory_space<vmem>>, vector<8x128xf32>
    %c0_4 = arith.constant 0 : index
    %c0_5 = arith.constant 0 : index
    %5 = vector.load %arg3[%c0_4, %c0_5] : memref<128x128xf32, #tpu.memory_space<vmem>>, vector<128x128xf32>
    %cst = arith.constant dense<0.000000e+00> : vector<8x128xf32>
    %6 = tpu.matmul %4, %5, %cst {dimension_numbers = #tpu.dot_dimension_numbers<[1], [0], [0], [1], [0, 0, 1, 1], [], []>} : vector<8x128xf32>, vector<128x128xf32>, vector<8x128xf32> -> vector<8x128xf32>
    %7 = arith.addf %3, %6 : vector<8x128xf32>
    %c0_6 = arith.constant 0 : index
    %c0_7 = arith.constant 0 : index
    %8 = vector.load %arg5[%c0_6, %c0_7] : memref<8x128xf32, #tpu.memory_space<vmem>>, vector<8x128xf32>
    tpu.vector_store %arg5[%c0_6, %c0_7], %7 {strides = array<i32>} : memref<8x128xf32, #tpu.memory_space<vmem>>, vector<8x128xf32>,
    %c0_i32_8 = arith.constant 0 : i32
    %9 = arith.cmpi eq, %arg1, %c0_i32_8 : i32
    %10 = arith.extui %9 : i1 to i32
    %c0_i32_9 = arith.constant 0 : i32
    %11 = arith.cmpi ne, %10, %c0_i32_9 : i32
    scf.if %11 {
      %c0_10 = arith.constant 0 : index
      %c0_11 = arith.constant 0 : index
      %12 = vector.load %arg5[%c0_10, %c0_11] : memref<8x128xf32, #tpu.memory_space<vmem>>, vector<8x128xf32>
      %13 = arith.mulf %12, %12 : vector<8x128xf32>
      %c0_12 = arith.constant 0 : index
      %c0_13 = arith.constant 0 : index
      %14 = vector.load %arg4[%c0_12, %c0_13] : memref<128x128xf32, #tpu.memory_space<vmem>>, vector<128x128xf32>
      %cst_14 = arith.constant dense<0.000000e+00> : vector<8x128xf32>
      %15 = tpu.matmul %13, %14, %cst_14 {dimension_numbers = #tpu.dot_dimension_numbers<[1], [0], [0], [1], [0, 0, 1, 1], [], []>} : vector<8x128xf32>, vector<128x128xf32>, vector<8x128xf32> -> vector<8x128xf32>
      %c0_15 = arith.constant 0 : index
      %c0_16 = arith.constant 0 : index
      %16 = vector.load %arg6[%c0_15, %c0_16] : memref<8x128xf32, #tpu.memory_space<vmem>>, vector<8x128xf32>
      tpu.vector_store %arg6[%c0_15, %c0_16], %15 {strides = array<i32>} : memref<8x128xf32, #tpu.memory_space<vmem>>, vector<8x128xf32>,
    } else {
    }
    return
  }
  func.func @transform_0(%arg0: i32, %arg1: i32) -> (i32, i32) {
    %c0_i32 = arith.constant 0 : i32
    return %arg0, %arg1 : i32, i32
  }
  func.func @transform_1(%arg0: i32, %arg1: i32) -> (i32, i32) {
    %c0_i32 = arith.constant 0 : i32
    %c0_i32_0 = arith.constant 0 : i32
    return %arg1, %c0_i32 : i32, i32
  }
  func.func @transform_2(%arg0: i32, %arg1: i32) -> (i32, i32) {
    %c0_i32 = arith.constant 0 : i32
    %c0_i32_0 = arith.constant 0 : i32
    %c0_i32_1 = arith.constant 0 : i32
    return %c0_i32, %c0_i32_0 : i32, i32
  }
  func.func @transform_3(%arg0: i32, %arg1: i32) -> (i32, i32) {
    %c0_i32 = arith.constant 0 : i32
    %c0_i32_0 = arith.constant 0 : i32
    return %arg0, %c0_i32 : i32, i32
  }
  func.func @transform_4(%arg0: i32, %arg1: i32) -> (i32, i32) {
    %c0_i32 = arith.constant 0 : i32
    %c0_i32_0 = arith.constant 0 : i32
    return %arg0, %c0_i32 : i32, i32
  }
}

</mosaic_0001>

<llo_original>
// kernel: _quantum_gate_forward_impl.1
$region0: #{_quantum_gate_forward_impl.1}
  #allocation0 [shape = 'u32[]', space=smem, size = 0x4, offset = 0x4, fixed_abs, tag = 'smem constant byte address 0x4 - core index']
  #allocation1 [shape = 'u32[144,128]{1,0:T(1,128)}', space=vmem, size = 0x12000, scoped, tag = 'internal scratch']
  %s0 = inlined_call_operand.vmem [shape: f32[8,128], index: 0, kind: input, shape index: {}, may-alias: {0,3}]
  %s1 = inlined_call_operand.vmem [shape: f32[128,128], index: 1, kind: input, shape index: {}]
  %s2 = inlined_call_operand.vmem [shape: f32[128,128], index: 2, kind: input, shape index: {}]
  %s3 = inlined_call_operand.vmem [shape: f32[8,128], index: 3, kind: output, shape index: {0}, may-alias: {0,3}]
  %s4 = inlined_call_operand.vmem [shape: f32[8,128], index: 4, kind: output, shape index: {1}]
  %5 = xla_tuple %s3, %s4
  %s6 = sld [smem:[#allocation0]]
  $region38: #{_quantum_gate_forward_impl.1} parent=0
    _
  %s8 = ssub.s32 1, %s6
  %s9 = scalar_select 0, %s8, %s6
  // Predicated region
  $region2: #{_quantum_gate_forward_impl.1} parent=0 // pred_check
    _
  $region3: #{_quantum_gate_forward_impl.1} parent=0 // pred_check_branch
    %11 = sbr.rel (0) target = $region5
  $region4: #{_quantum_gate_forward_impl.1} parent=0 // pred_region
    _
  $region5: #{_quantum_gate_forward_impl.1} parent=0 // pred_fallthru
    _
  // Predicated region
  $region6: #{_quantum_gate_forward_impl.1} parent=0 // pred_check
    _
  $region7: #{_quantum_gate_forward_impl.1} parent=0 // pred_check_branch
    %13 = sbr.rel (0) target = $region9
  $region8: #{_quantum_gate_forward_impl.1} parent=0 // pred_region
    _
  $region9: #{_quantum_gate_forward_impl.1} parent=0 // pred_fallthru
    _
  // Predicated region
  $region10: #{_quantum_gate_forward_impl.1} parent=0 // pred_check
    _
  $region11: #{_quantum_gate_forward_impl.1} parent=0 // pred_check_branch
    %15 = sbr.rel (0) target = $region13
  $region12: #{_quantum_gate_forward_impl.1} parent=0 // pred_region
    _
  $region13: #{_quantum_gate_forward_impl.1} parent=0 // pred_fallthru
    _
  %p16 = scmp.eq.s32.totalorder 0, 0
  // Predicated region
  $region14: #{_quantum_gate_forward_impl.1} parent=0 // pred_check
    %p17 = pneg %p16
  $region15: #{_quantum_gate_forward_impl.1} parent=0 // pred_check_branch
    %19 = sbr.rel (%p17) target = $region17
  $region16: #{_quantum_gate_forward_impl.1} parent=0 // pred_region
    %20 = vst [vmem:[%s3] sm:$0xff] 0.0
  $region17: #{_quantum_gate_forward_impl.1} parent=0 // pred_fallthru
    _
  %v21 = vld [vmem:[%s3] sm:$0xff]
  %v22 = vld [vmem:[%s0] sm:$0xff]
  %v23 = vld [vmem:[%s1] sm:$0xff]
  %v24 = vld [vmem:[%s1 + $0x8] sm:$0xff]
  %v25 = vld [vmem:[%s1 + $0x10] sm:$0xff]
  %v26 = vld [vmem:[%s1 + $0x18] sm:$0xff]
  %v27 = vld [vmem:[%s1 + $0x20] sm:$0xff]
  %v28 = vld [vmem:[%s1 + $0x28] sm:$0xff]
  %v29 = vld [vmem:[%s1 + $0x30] sm:$0xff]
  %v30 = vld [vmem:[%s1 + $0x38] sm:$0xff]
  %v31 = vld [vmem:[%s1 + $0x40] sm:$0xff]
  %v32 = vld [vmem:[%s1 + $0x48] sm:$0xff]
  %v33 = vld [vmem:[%s1 + $0x50] sm:$0xff]
  %v34 = vld [vmem:[%s1 + $0x58] sm:$0xff]
  %v35 = vld [vmem:[%s1 + $0x60] sm:$0xff]
  %v36 = vld [vmem:[%s1 + $0x68] sm:$0xff]
  %v37 = vld [vmem:[%s1 + $0x70] sm:$0xff]
  %v38 = vld [vmem:[%s1 + $0x78] sm:$0xff]
  %39 = vmatprep.subr.mxu0 0.0
  %40 = vmatpush1.msra.mxu0 %v23
  %41 = vmatprep.subr.mxu0 0.0
  %42 = vmatpush1.msra.mxu0 %v24
  %43 = vmatprep.subr.mxu0 0.0
  %44 = vmatpush1.msra.mxu0 %v25
  %45 = vmatprep.subr.mxu0 0.0
  %46 = vmatpush1.msra.mxu0 %v26
  %47 = vmatprep.subr.mxu0 0.0
  %48 = vmatpush1.msra.mxu0 %v27
  %49 = vmatprep.subr.mxu0 0.0
  %50 = vmatpush1.msra.mxu0 %v28
  %51 = vmatprep.subr.mxu0 0.0
  %52 = vmatpush1.msra.mxu0 %v29
  %53 = vmatprep.subr.mxu0 0.0
  %54 = vmatpush1.msra.mxu0 %v30
  %55 = vmatprep.subr.mxu0 0.0
  %56 = vmatpush1.msra.mxu0 %v31
  %57 = vmatprep.subr.mxu0 0.0
  %58 = vmatpush1.msra.mxu0 %v32
  %59 = vmatprep.subr.mxu0 0.0
  %60 = vmatpush1.msra.mxu0 %v33
  %61 = vmatprep.subr.mxu0 0.0
  %62 = vmatpush1.msra.mxu0 %v34
  %63 = vmatprep.subr.mxu0 0.0
  %64 = vmatpush1.msra.mxu0 %v35
  %65 = vmatprep.subr.mxu0 0.0
  %66 = vmatpush1.msra.mxu0 %v36
  %67 = vmatprep.subr.mxu0 0.0
  %68 = vmatpush1.msra.mxu0 %v37
  %69 = vmatprep.subr.mxu0 0.0
  %70 = vmatpush1.msra.mxu0 %v38
  %71 = vmatprep.subr.mxu0 0.0
  %72 = vmatpush1.msra.mxu0 0.0
  %73 = vmatprep.subr.mxu0 0.0
  %74 = vmatpush1.msra.mxu0 0.0
  %75 = vmatprep.subr.mxu0 0.0
  %76 = vmatpush1.msra.mxu0 0.0
  %77 = vmatprep.subr.mxu0 0.0
  %78 = vmatpush1.msra.mxu0 0.0
  %79 = vmatprep.subr.mxu0 0.0
  %80 = vmatpush1.msra.mxu0 0.0
  %81 = vmatprep.subr.mxu0 0.0
  %82 = vmatpush1.msra.mxu0 0.0
  %83 = vmatprep.subr.mxu0 0.0
  %84 = vmatpush1.msra.mxu0 0.0
  %85 = vmatprep.subr.mxu0 0.0
  %86 = vmatpush1.msra.mxu0 0.0
  %87 = vmatprep.subr.mxu0 0.0
  %88 = vmatpush1.msra.mxu0 0.0
  %89 = vmatprep.subr.mxu0 0.0
  %90 = vmatpush1.msra.mxu0 0.0
  %91 = vmatprep.subr.mxu0 0.0
  %92 = vmatpush1.msra.mxu0 0.0
  %93 = vmatprep.subr.mxu0 0.0
  %94 = vmatpush1.msra.mxu0 0.0
  %95 = vmatprep.subr.mxu0 0.0
  %96 = vmatpush1.msra.mxu0 0.0
  %97 = vmatprep.subr.mxu0 0.0
  %98 = vmatpush1.msra.mxu0 0.0
  %99 = vmatprep.subr.mxu0 0.0
  %100 = vmatpush1.msra.mxu0 0.0
  %101 = vmatprep.subr.mxu0 0.0
  %102 = vmatpush1.msra.mxu0 0.0
  %103 = vmatprep.mubr.f32.mxu0 0.0
  %104 = vmatmul.mubr.f32.gmra.mrb[0].mxu0 %v22
  %v105 = vpop.f32.mrb[0].mxu0
  %v106 = vadd.f32 0.0, %v105
  %v107 = vpop.f32.mrb[0].mxu0
  %108 = vdwg.mxu0
  %v109 = vadd.f32 %v21, %v106
  %110 = vst [vmem:[%s3] sm:$0xff] %v109
  // Predicated region
  $region18: #{_quantum_gate_forward_impl.1} parent=0 // pred_check
    %p111 = pneg %p16
  $region19: #{_quantum_gate_forward_impl.1} parent=0 // pred_check_branch
    %113 = sbr.rel (%p111) target = $region21
  $region20: #{_quantum_gate_forward_impl.1} parent=0 // pred_region
    %v114 = vld [vmem:[%s3] sm:$0xff]
    %v115 = vmul.f32 %v114, %v114
    %v116 = vld [vmem:[%s2] sm:$0xff]
    %v117 = vld [vmem:[%s2 + $0x8] sm:$0xff]
    %v118 = vld [vmem:[%s2 + $0x10] sm:$0xff]
    %v119 = vld [vmem:[%s2 + $0x18] sm:$0xff]
    %v120 = vld [vmem:[%s2 + $0x20] sm:$0xff]
    %v121 = vld [vmem:[%s2 + $0x28] sm:$0xff]
    %v122 = vld [vmem:[%s2 + $0x30] sm:$0xff]
    %v123 = vld [vmem:[%s2 + $0x38] sm:$0xff]
    %v124 = vld [vmem:[%s2 + $0x40] sm:$0xff]
    %v125 = vld [vmem:[%s2 + $0x48] sm:$0xff]
    %v126 = vld [vmem:[%s2 + $0x50] sm:$0xff]
    %v127 = vld [vmem:[%s2 + $0x58] sm:$0xff]
    %v128 = vld [vmem:[%s2 + $0x60] sm:$0xff]
    %v129 = vld [vmem:[%s2 + $0x68] sm:$0xff]
    %v130 = vld [vmem:[%s2 + $0x70] sm:$0xff]
    %v131 = vld [vmem:[%s2 + $0x78] sm:$0xff]
    %132 = vmatprep.subr.mxu0 0.0
    %133 = vmatpush1.msra.mxu0 %v116
    %134 = vmatprep.subr.mxu0 0.0
    %135 = vmatpush1.msra.mxu0 %v117
    %136 = vmatprep.subr.mxu0 0.0
    %137 = vmatpush1.msra.mxu0 %v118
    %138 = vmatprep.subr.mxu0 0.0
    %139 = vmatpush1.msra.mxu0 %v119
    %140 = vmatprep.subr.mxu0 0.0
    %141 = vmatpush1.msra.mxu0 %v120
    %142 = vmatprep.subr.mxu0 0.0
    %143 = vmatpush1.msra.mxu0 %v121
    %144 = vmatprep.subr.mxu0 0.0
    %145 = vmatpush1.msra.mxu0 %v122
    %146 = vmatprep.subr.mxu0 0.0
    %147 = vmatpush1.msra.mxu0 %v123
    %148 = vmatprep.subr.mxu0 0.0
    %149 = vmatpush1.msra.mxu0 %v124
    %150 = vmatprep.subr.mxu0 0.0
    %151 = vmatpush1.msra.mxu0 %v125
    %152 = vmatprep.subr.mxu0 0.0
    %153 = vmatpush1.msra.mxu0 %v126
    %154 = vmatprep.subr.mxu0 0.0
    %155 = vmatpush1.msra.mxu0 %v127
    %156 = vmatprep.subr.mxu0 0.0
    %157 = vmatpush1.msra.mxu0 %v128
    %158 = vmatprep.subr.mxu0 0.0
    %159 = vmatpush1.msra.mxu0 %v129
    %160 = vmatprep.subr.mxu0 0.0
    %161 = vmatpush1.msra.mxu0 %v130
    %162 = vmatprep.subr.mxu0 0.0
    %163 = vmatpush1.msra.mxu0 %v131
    %164 = vmatprep.subr.mxu0 0.0
    %165 = vmatpush1.msra.mxu0 0.0
    %166 = vmatprep.subr.mxu0 0.0
    %167 = vmatpush1.msra.mxu0 0.0
    %168 = vmatprep.subr.mxu0 0.0
    %169 = vmatpush1.msra.mxu0 0.0
    %170 = vmatprep.subr.mxu0 0.0
    %171 = vmatpush1.msra.mxu0 0.0
    %172 = vmatprep.subr.mxu0 0.0
    %173 = vmatpush1.msra.mxu0 0.0
    %174 = vmatprep.subr.mxu0 0.0
    %175 = vmatpush1.msra.mxu0 0.0
    %176 = vmatprep.subr.mxu0 0.0
    %177 = vmatpush1.msra.mxu0 0.0
    %178 = vmatprep.subr.mxu0 0.0
    %179 = vmatpush1.msra.mxu0 0.0
    %180 = vmatprep.subr.mxu0 0.0
    %181 = vmatpush1.msra.mxu0 0.0
    %182 = vmatprep.subr.mxu0 0.0
    %183 = vmatpush1.msra.mxu0 0.0
    %184 = vmatprep.subr.mxu0 0.0
    %185 = vmatpush1.msra.mxu0 0.0
    %186 = vmatprep.subr.mxu0 0.0
    %187 = vmatpush1.msra.mxu0 0.0
    %188 = vmatprep.subr.mxu0 0.0
    %189 = vmatpush1.msra.mxu0 0.0
    %190 = vmatprep.subr.mxu0 0.0
    %191 = vmatpush1.msra.mxu0 0.0
    %192 = vmatprep.subr.mxu0 0.0
    %193 = vmatpush1.msra.mxu0 0.0
    %194 = vmatprep.subr.mxu0 0.0
    %195 = vmatpush1.msra.mxu0 0.0
    %196 = vmatprep.mubr.f32.mxu0 0.0
    %197 = vmatmul.mubr.f32.gmra.mrb[0].mxu0 %v115
    %v198 = vpop.f32.mrb[0].mxu0
    %v199 = vadd.f32 0.0, %v198
    %v200 = vpop.f32.mrb[0].mxu0
    %201 = vdwg.mxu0
    %202 = vst [vmem:[%s4] sm:$0xff] %v199
  $region21: #{_quantum_gate_forward_impl.1} parent=0 // pred_fallthru
    _
  // Predicated region
  $region22: #{_quantum_gate_forward_impl.1} parent=0 // pred_check
    _
  $region23: #{_quantum_gate_forward_impl.1} parent=0 // pred_check_branch
    %204 = sbr.rel (0) target = $region25
  $region24: #{_quantum_gate_forward_impl.1} parent=0 // pred_region
    _
  $region25: #{_quantum_gate_forward_impl.1} parent=0 // pred_fallthru
    _
  // Predicated region
  $region26: #{_quantum_gate_forward_impl.1} parent=0 // pred_check
    _
  $region27: #{_quantum_gate_forward_impl.1} parent=0 // pred_check_branch
    %206 = sbr.rel (0) target = $region29
  $region28: #{_quantum_gate_forward_impl.1} parent=0 // pred_region
    _
  $region29: #{_quantum_gate_forward_impl.1} parent=0 // pred_fallthru
    _
  // Predicated region
  $region30: #{_quantum_gate_forward_impl.1} parent=0 // pred_check
    _
  $region31: #{_quantum_gate_forward_impl.1} parent=0 // pred_check_branch
    %208 = sbr.rel (0) target = $region33
  $region32: #{_quantum_gate_forward_impl.1} parent=0 // pred_region
    _
  $region33: #{_quantum_gate_forward_impl.1} parent=0 // pred_fallthru
    _
  // Predicated region
  $region34: #{_quantum_gate_forward_impl.1} parent=0 // pred_check
    _
  $region35: #{_quantum_gate_forward_impl.1} parent=0 // pred_check_branch
    %210 = sbr.rel (0) target = $region37
  $region36: #{_quantum_gate_forward_impl.1} parent=0 // pred_region
    _
  $region37: #{_quantum_gate_forward_impl.1} parent=0 // pred_fallthru
    _

// kernel: _quantum_gate_forward_impl.1
$region0: #{_quantum_gate_forward_impl.1}
  #allocation0 [shape = 'u32[]', space=smem, size = 0x4, offset = 0x4, fixed_abs, tag = 'smem constant byte address 0x4 - core index']
  #allocation1 [shape = 'u32[144,128]{1,0:T(1,128)}', space=vmem, size = 0x12000, scoped, tag = 'internal scratch']
  %s0 = inlined_call_operand.vmem [shape: f32[8,128], index: 0, kind: input, shape index: {}, may-alias: {0,3}]
  %s1 = inlined_call_operand.vmem [shape: f32[128,128], index: 1, kind: input, shape index: {}]
  %s2 = inlined_call_operand.vmem [shape: f32[128,128], index: 2, kind: input, shape index: {}]
  %s3 = inlined_call_operand.vmem [shape: f32[8,128], index: 3, kind: output, shape index: {0}, may-alias: {0,3}]
  %s4 = inlined_call_operand.vmem [shape: f32[8,128], index: 4, kind: output, shape index: {1}]
  %5 = xla_tuple %s3, %s4
  %s6 = sld [smem:[#allocation0]]
  $region38: #{_quantum_gate_forward_impl.1} parent=0
    _
  %s8 = ssub.s32 1, %s6
  %s9 = scalar_select 0, %s8, %s6
  // Predicated region
  $region2: #{_quantum_gate_forward_impl.1} parent=0 // pred_check
    _
  $region3: #{_quantum_gate_forward_impl.1} parent=0 // pred_check_branch
    %11 = sbr.rel (0) target = $region5
  $region4: #{_quantum_gate_forward_impl.1} parent=0 // pred_region
    _
  $region5: #{_quantum_gate_forward_impl.1} parent=0 // pred_fallthru
    _
  // Predicated region
  $region6: #{_quantum_gate_forward_impl.1} parent=0 // pred_check
    _
  $region7: #{_quantum_gate_forward_impl.1} parent=0 // pred_check_branch
    %13 = sbr.rel (0) target = $region9
  $region8: #{_quantum_gate_forward_impl.1} parent=0 // pred_region
    _
  $region9: #{_quantum_gate_forward_impl.1} parent=0 // pred_fallthru
    _
  // Predicated region
  $region10: #{_quantum_gate_forward_impl.1} parent=0 // pred_check
    _
  $region11: #{_quantum_gate_forward_impl.1} parent=0 // pred_check_branch
    %15 = sbr.rel (0) target = $region13
  $region12: #{_quantum_gate_forward_impl.1} parent=0 // pred_region
    _
  $region13: #{_quantum_gate_forward_impl.1} parent=0 // pred_fallthru
    _
  %p16 = scmp.eq.s32.totalorder 0, 0
  // Predicated region
  $region14: #{_quantum_gate_forward_impl.1} parent=0 // pred_check
    %p17 = pneg %p16
  $region15: #{_quantum_gate_forward_impl.1} parent=0 // pred_check_branch
    %19 = sbr.rel (%p17) target = $region17
  $region16: #{_quantum_gate_forward_impl.1} parent=0 // pred_region
    %20 = vst [vmem:[%s3] sm:$0xff] 0.0
  $region17: #{_quantum_gate_forward_impl.1} parent=0 // pred_fallthru
    _
  %v21 = vld [vmem:[%s3] sm:$0xff]
  %v22 = vld [vmem:[%s0] sm:$0xff]
  %v23 = vld [vmem:[%s1] sm:$0xff]
  %v24 = vld [vmem:[%s1 + $0x8] sm:$0xff]
  %v25 = vld [vmem:[%s1 + $0x10] sm:$0xff]
  %v26 = vld [vmem:[%s1 + $0x18] sm:$0xff]
  %v27 = vld [vmem:[%s1 + $0x20] sm:$0xff]
  %v28 = vld [vmem:[%s1 + $0x28] sm:$0xff]
  %v29 = vld [vmem:[%s1 + $0x30] sm:$0xff]
  %v30 = vld [vmem:[%s1 + $0x38] sm:$0xff]
  %v31 = vld [vmem:[%s1 + $0x40] sm:$0xff]
  %v32 = vld [vmem:[%s1 + $0x48] sm:$0xff]
  %v33 = vld [vmem:[%s1 + $0x50] sm:$0xff]
  %v34 = vld [vmem:[%s1 + $0x58] sm:$0xff]
  %v35 = vld [vmem:[%s1 + $0x60] sm:$0xff]
  %v36 = vld [vmem:[%s1 + $0x68] sm:$0xff]
  %v37 = vld [vmem:[%s1 + $0x70] sm:$0xff]
  %v38 = vld [vmem:[%s1 + $0x78] sm:$0xff]
  %39 = vmatprep.subr.mxu0 0.0
  %40 = vmatpush1.msra.mxu0 %v23
  %41 = vmatprep.subr.mxu0 0.0
  %42 = vmatpush1.msra.mxu0 %v24
  %43 = vmatprep.subr.mxu0 0.0
  %44 = vmatpush1.msra.mxu0 %v25
  %45 = vmatprep.subr.mxu0 0.0
  %46 = vmatpush1.msra.mxu0 %v26
  %47 = vmatprep.subr.mxu0 0.0
  %48 = vmatpush1.msra.mxu0 %v27
  %49 = vmatprep.subr.mxu0 0.0
  %50 = vmatpush1.msra.mxu0 %v28
  %51 = vmatprep.subr.mxu0 0.0
  %52 = vmatpush1.msra.mxu0 %v29
  %53 = vmatprep.subr.mxu0 0.0
  %54 = vmatpush1.msra.mxu0 %v30
  %55 = vmatprep.subr.mxu0 0.0
  %56 = vmatpush1.msra.mxu0 %v31
  %57 = vmatprep.subr.mxu0 0.0
  %58 = vmatpush1.msra.mxu0 %v32
  %59 = vmatprep.subr.mxu0 0.0
  %60 = vmatpush1.msra.mxu0 %v33
  %61 = vmatprep.subr.mxu0 0.0
  %62 = vmatpush1.msra.mxu0 %v34
  %63 = vmatprep.subr.mxu0 0.0
  %64 = vmatpush1.msra.mxu0 %v35
  %65 = vmatprep.subr.mxu0 0.0
  %66 = vmatpush1.msra.mxu0 %v36
  %67 = vmatprep.subr.mxu0 0.0
  %68 = vmatpush1.msra.mxu0 %v37
  %69 = vmatprep.subr.mxu0 0.0
  %70 = vmatpush1.msra.mxu0 %v38
  %71 = vmatprep.subr.mxu0 0.0
  %72 = vmatpush1.msra.mxu0 0.0
  %73 = vmatprep.subr.mxu0 0.0
  %74 = vmatpush1.msra.mxu0 0.0
  %75 = vmatprep.subr.mxu0 0.0
  %76 = vmatpush1.msra.mxu0 0.0
  %77 = vmatprep.subr.mxu0 0.0
  %78 = vmatpush1.msra.mxu0 0.0
  %79 = vmatprep.subr.mxu0 0.0
  %80 = vmatpush1.msra.mxu0 0.0
  %81 = vmatprep.subr.mxu0 0.0
  %82 = vmatpush1.msra.mxu0 0.0
  %83 = vmatprep.subr.mxu0 0.0
  %84 = vmatpush1.msra.mxu0 0.0
  %85 = vmatprep.subr.mxu0 0.0
  %86 = vmatpush1.msra.mxu0 0.0
  %87 = vmatprep.subr.mxu0 0.0
  %88 = vmatpush1.msra.mxu0 0.0
  %89 = vmatprep.subr.mxu0 0.0
  %90 = vmatpush1.msra.mxu0 0.0
  %91 = vmatprep.subr.mxu0 0.0
  %92 = vmatpush1.msra.mxu0 0.0
  %93 = vmatprep.subr.mxu0 0.0
  %94 = vmatpush1.msra.mxu0 0.0
  %95 = vmatprep.subr.mxu0 0.0
  %96 = vmatpush1.msra.mxu0 0.0
  %97 = vmatprep.subr.mxu0 0.0
  %98 = vmatpush1.msra.mxu0 0.0
  %99 = vmatprep.subr.mxu0 0.0
  %100 = vmatpush1.msra.mxu0 0.0
  %101 = vmatprep.subr.mxu0 0.0
  %102 = vmatpush1.msra.mxu0 0.0
  %103 = vmatprep.mubr.f32.mxu0 0.0
  %104 = vmatmul.mubr.f32.gmra.mrb[0].mxu0 %v22
  %v105 = vpop.f32.mrb[0].mxu0
  %v106 = vadd.f32 0.0, %v105
  %v107 = vpop.f32.mrb[0].mxu0
  %108 = vdwg.mxu0
  %v109 = vadd.f32 %v21, %v106
  %110 = vst [vmem:[%s3] sm:$0xff] %v109
  // Predicated region
  $region18: #{_quantum_gate_forward_impl.1} parent=0 // pred_check
    %p111 = pneg %p16
  $region19: #{_quantum_gate_forward_impl.1} parent=0 // pred_check_branch
    %113 = sbr.rel (%p111) target = $region21
  $region20: #{_quantum_gate_forward_impl.1} parent=0 // pred_region
    %v114 = vld [vmem:[%s3] sm:$0xff]
    %v115 = vmul.f32 %v114, %v114
    %v116 = vld [vmem:[%s2] sm:$0xff]
    %v117 = vld [vmem:[%s2 + $0x8] sm:$0xff]
    %v118 = vld [vmem:[%s2 + $0x10] sm:$0xff]
    %v119 = vld [vmem:[%s2 + $0x18] sm:$0xff]
    %v120 = vld [vmem:[%s2 + $0x20] sm:$0xff]
    %v121 = vld [vmem:[%s2 + $0x28] sm:$0xff]
    %v122 = vld [vmem:[%s2 + $0x30] sm:$0xff]
    %v123 = vld [vmem:[%s2 + $0x38] sm:$0xff]
    %v124 = vld [vmem:[%s2 + $0x40] sm:$0xff]
    %v125 = vld [vmem:[%s2 + $0x48] sm:$0xff]
    %v126 = vld [vmem:[%s2 + $0x50] sm:$0xff]
    %v127 = vld [vmem:[%s2 + $0x58] sm:$0xff]
    %v128 = vld [vmem:[%s2 + $0x60] sm:$0xff]
    %v129 = vld [vmem:[%s2 + $0x68] sm:$0xff]
    %v130 = vld [vmem:[%s2 + $0x70] sm:$0xff]
    %v131 = vld [vmem:[%s2 + $0x78] sm:$0xff]
    %132 = vmatprep.subr.mxu0 0.0
    %133 = vmatpush1.msra.mxu0 %v116
    %134 = vmatprep.subr.mxu0 0.0
    %135 = vmatpush1.msra.mxu0 %v117
    %136 = vmatprep.subr.mxu0 0.0
    %137 = vmatpush1.msra.mxu0 %v118
    %138 = vmatprep.subr.mxu0 0.0
    %139 = vmatpush1.msra.mxu0 %v119
    %140 = vmatprep.subr.mxu0 0.0
    %141 = vmatpush1.msra.mxu0 %v120
    %142 = vmatprep.subr.mxu0 0.0
    %143 = vmatpush1.msra.mxu0 %v121
    %144 = vmatprep.subr.mxu0 0.0
    %145 = vmatpush1.msra.mxu0 %v122
    %146 = vmatprep.subr.mxu0 0.0
    %147 = vmatpush1.msra.mxu0 %v123
    %148 = vmatprep.subr.mxu0 0.0
    %149 = vmatpush1.msra.mxu0 %v124
    %150 = vmatprep.subr.mxu0 0.0
    %151 = vmatpush1.msra.mxu0 %v125
    %152 = vmatprep.subr.mxu0 0.0
    %153 = vmatpush1.msra.mxu0 %v126
    %154 = vmatprep.subr.mxu0 0.0
    %155 = vmatpush1.msra.mxu0 %v127
    %156 = vmatprep.subr.mxu0 0.0
    %157 = vmatpush1.msra.mxu0 %v128
    %158 = vmatprep.subr.mxu0 0.0
    %159 = vmatpush1.msra.mxu0 %v129
    %160 = vmatprep.subr.mxu0 0.0
    %161 = vmatpush1.msra.mxu0 %v130
    %162 = vmatprep.subr.mxu0 0.0
    %163 = vmatpush1.msra.mxu0 %v131
    %164 = vmatprep.subr.mxu0 0.0
    %165 = vmatpush1.msra.mxu0 0.0
    %166 = vmatprep.subr.mxu0 0.0
    %167 = vmatpush1.msra.mxu0 0.0
    %168 = vmatprep.subr.mxu0 0.0
    %169 = vmatpush1.msra.mxu0 0.0
    %170 = vmatprep.subr.mxu0 0.0
    %171 = vmatpush1.msra.mxu0 0.0
    %172 = vmatprep.subr.mxu0 0.0
    %173 = vmatpush1.msra.mxu0 0.0
    %174 = vmatprep.subr.mxu0 0.0
    %175 = vmatpush1.msra.mxu0 0.0
    %176 = vmatprep.subr.mxu0 0.0
    %177 = vmatpush1.msra.mxu0 0.0
    %178 = vmatprep.subr.mxu0 0.0
    %179 = vmatpush1.msra.mxu0 0.0
    %180 = vmatprep.subr.mxu0 0.0
    %181 = vmatpush1.msra.mxu0 0.0
    %182 = vmatprep.subr.mxu0 0.0
    %183 = vmatpush1.msra.mxu0 0.0
    %184 = vmatprep.subr.mxu0 0.0
    %185 = vmatpush1.msra.mxu0 0.0
    %186 = vmatprep.subr.mxu0 0.0
    %187 = vmatpush1.msra.mxu0 0.0
    %188 = vmatprep.subr.mxu0 0.0
    %189 = vmatpush1.msra.mxu0 0.0
    %190 = vmatprep.subr.mxu0 0.0
    %191 = vmatpush1.msra.mxu0 0.0
    %192 = vmatprep.subr.mxu0 0.0
    %193 = vmatpush1.msra.mxu0 0.0
    %194 = vmatprep.subr.mxu0 0.0
    %195 = vmatpush1.msra.mxu0 0.0
    %196 = vmatprep.mubr.f32.mxu0 0.0
    %197 = vmatmul.mubr.f32.gmra.mrb[0].mxu0 %v115
    %v198 = vpop.f32.mrb[0].mxu0
    %v199 = vadd.f32 0.0, %v198
    %v200 = vpop.f32.mrb[0].mxu0
    %201 = vdwg.mxu0
    %202 = vst [vmem:[%s4] sm:$0xff] %v199
  $region21: #{_quantum_gate_forward_impl.1} parent=0 // pred_fallthru
    _
  // Predicated region
  $region22: #{_quantum_gate_forward_impl.1} parent=0 // pred_check
    _
  $region23: #{_quantum_gate_forward_impl.1} parent=0 // pred_check_branch
    %204 = sbr.rel (0) target = $region25
  $region24: #{_quantum_gate_forward_impl.1} parent=0 // pred_region
    _
  $region25: #{_quantum_gate_forward_impl.1} parent=0 // pred_fallthru
    _
  // Predicated region
  $region26: #{_quantum_gate_forward_impl.1} parent=0 // pred_check
    _
  $region27: #{_quantum_gate_forward_impl.1} parent=0 // pred_check_branch
    %206 = sbr.rel (0) target = $region29
  $region28: #{_quantum_gate_forward_impl.1} parent=0 // pred_region
    _
  $region29: #{_quantum_gate_forward_impl.1} parent=0 // pred_fallthru
    _
  // Predicated region
  $region30: #{_quantum_gate_forward_impl.1} parent=0 // pred_check
    _
  $region31: #{_quantum_gate_forward_impl.1} parent=0 // pred_check_branch
    %208 = sbr.rel (0) target = $region33
  $region32: #{_quantum_gate_forward_impl.1} parent=0 // pred_region
    _
  $region33: #{_quantum_gate_forward_impl.1} parent=0 // pred_fallthru
    _
  // Predicated region
  $region34: #{_quantum_gate_forward_impl.1} parent=0 // pred_check
    _
  $region35: #{_quantum_gate_forward_impl.1} parent=0 // pred_check_branch
    %210 = sbr.rel (0) target = $region37
  $region36: #{_quantum_gate_forward_impl.1} parent=0 // pred_region
    _
  $region37: #{_quantum_gate_forward_impl.1} parent=0 // pred_fallthru
    _

</llo_original>
